<compile_context>
chip_gen: v7x
topology: tpu7x:2x2x1
jax: 0.10.0
libtpu: 0.0.40
codegen_flags: <defaults>
</compile_context>

<pallas_src>
import functools

import jax
import jax.numpy as jnp
from jax import lax
from jax.experimental import pallas as pl
from jax.experimental.pallas import tpu as pltpu

LANE = 128
SUBLANE = 8


def _round_up(x, m):
    return (x + m - 1) // m * m


def _fcn_kernel(x_ref, w0_ref, b0_ref, wh_ref, bh_ref, we_ref, be_ref, o_ref,
                *, n_hidden_layers, n_in, n_out):
    x = x_ref[...]

    # ---- input layer: Linear(N_INPUT, H) + tanh ----
    if n_in <= 4:
        # K is truly tiny: a K=n_in MXU matmul wastes nearly the whole systolic
        # array on zeros; do a rank-n_in VPU outer product (lane splat of
        # x[:, k:k+1] is cheap). Convert bf16 weights to f32 once, hoisted.
        w0 = w0_ref[...].astype(jnp.float32)
        acc = b0_ref[...]                                   # (1, Hp) f32, broadcasts
        for k in range(n_in):
            acc = acc + x[:, k:k + 1] * w0[k:k + 1, :]      # (TB,1)*(1,Hp) on VPU
    else:
        acc = jnp.dot(x.astype(jnp.bfloat16), w0_ref[...],
                      preferred_element_type=jnp.float32) + b0_ref[...]
    h = jnp.tanh(acc)                                       # f32 tanh (EUP)

    # ---- hidden layers: (N_LAYERS-1) x [Linear(H, H) + tanh] ----
    def layer(hh, w, b):
        # bf16 operands on the MXU, f32 accumulation, f32 bias add + tanh.
        p = jnp.dot(hh.astype(jnp.bfloat16), w, preferred_element_type=jnp.float32)
        return jnp.tanh(p + b)

    if n_hidden_layers > 8:
        # Many layers: dynamic loop bounds vreg live ranges (avoids spills).
        h = lax.fori_loop(
            0, n_hidden_layers,
            lambda i, hh: layer(hh, wh_ref[i], bh_ref[i]), h)
    else:
        # Few layers (compile-time constant): fully unrolled static loop.
        for i in range(n_hidden_layers):
            h = layer(h, wh_ref[i], bh_ref[i])

    # ---- output layer: Linear(H, N_OUTPUT) ----
    y = jnp.dot(h.astype(jnp.bfloat16), we_ref[...],
                preferred_element_type=jnp.float32) + be_ref[...]
    # Store only the real n_out columns. The output block's last dim equals the
    # (unpadded) array's last dim, so HBM writeback is tb*n_out elements per
    # step instead of a 128-lane padded slab.
    o_ref[...] = y[:, :n_out].astype(o_ref.dtype)


def prepare_params(params, weight_dtype=jnp.bfloat16):
    """Zero-pad to 128-lane widths and cast weights to bf16, once, outside the
    kernel. Padding is exact: padded weight rows/cols and biases are zero, so
    padded hidden lanes stay tanh(0)=0 and never contaminate real lanes."""
    w0, b0 = params["w0"], params["b0"]
    wh, bh = params["wh"], params["bh"]
    we, be = params["we"], params["be"]
    n_in, n_hid = w0.shape
    n_out = we.shape[1]
    hp = _round_up(n_hid, LANE)
    op = _round_up(n_out, LANE)
    lh = wh.shape[0]
    bias_dtype = jnp.float32   # bias add + tanh stay f32 on every generation

    w0p = jnp.zeros((n_in, hp), weight_dtype).at[:, :n_hid].set(w0.astype(weight_dtype))
    b0p = jnp.zeros((1, hp), bias_dtype).at[:, :n_hid].set(b0.astype(bias_dtype))
    if lh > 0:
        whp = jnp.zeros((lh, hp, hp), weight_dtype).at[:, :n_hid, :n_hid].set(
            wh.astype(weight_dtype))
        bhp = jnp.zeros((lh, 1, hp), bias_dtype).at[:, :, :n_hid].set(
            bh.astype(bias_dtype))
    else:
        # N_LAYERS == 1: the kernel never reads these; pass one minimal
        # (8,128) tile so the unused DMA/VMEM cost is ~4 KB, not hp*hp.
        whp = jnp.zeros((1, SUBLANE, LANE), weight_dtype)
        bhp = jnp.zeros((1, 1, LANE), bias_dtype)
    wep = jnp.zeros((hp, op), weight_dtype).at[:n_hid, :n_out].set(we.astype(weight_dtype))
    bep = jnp.zeros((1, op), bias_dtype).at[:, :n_out].set(be.astype(bias_dtype))

    return dict(w0=w0p, b0=b0p, wh=whp, bh=bhp, we=wep, be=bep,
                n_hidden_layers=lh, n_in=n_in, n_out=n_out)


def _vmem_capacity_bytes():
    try:
        info = pltpu.get_tpu_info()
        cap = getattr(info, "vmem_capacity_bytes", None)
        if cap:
            return int(cap)
    except Exception:
        pass
    return 64 * 1024 * 1024   # conservative default (v7x per-TensorCore)


def fcn_forward(x, prepared, *, block_rows=1024):
    """Full FCN forward pass in one fused Pallas kernel, tiled over the batch."""
    w0, b0 = prepared["w0"], prepared["b0"]
    wh, bh = prepared["wh"], prepared["bh"]
    we, be = prepared["we"], prepared["be"]
    n_hidden_layers = prepared["n_hidden_layers"]
    n_in = prepared["n_in"]
    n_out = prepared["n_out"]

    B = x.shape[0]
    hp = w0.shape[1]
    op = we.shape[1]

    # Batch tile: as large as reasonable (amortizes ~0.35 us per-grid-step
    # overhead, keeps the MXU M-dim fed), /8-aligned, but capped at ceil(B/2)
    # so the grid has >= 2 steps whenever B allows it -> both v7x TensorCores.
    half = _round_up(max(1, -(-B // 2)), SUBLANE)
    tb = max(SUBLANE, min(_round_up(block_rows, SUBLANE), half))
    b_pad = _round_up(B, tb)
    if b_pad != B:
        x = jnp.zeros((b_pad, n_in), x.dtype).at[:B].set(x)
    grid = (b_pad // tb,)

    kernel = functools.partial(_fcn_kernel, n_hidden_layers=n_hidden_layers,
                               n_in=n_in, n_out=n_out)

    # ---- VMEM budget: generation-aware cap, real dtype itemsizes ----
    def nbytes(a):
        return a.size * a.dtype.itemsize
    weight_bytes = sum(nbytes(a) for a in (w0, b0, wh, bh, we, be))
    in_pad = _round_up(max(n_in, 1), LANE)
    io_bytes = 2 * tb * (in_pad + op) * x.dtype.itemsize    # dbl-buffered x/out tiles
    act_bytes = 6 * tb * hp * 4                             # f32 activation temps
    cap = _vmem_capacity_bytes()
    headroom = 16 * 1024 * 1024                             # compiler internal scratch
    need = weight_bytes * 2 + io_bytes + act_bytes + (2 << 20)
    vmem_limit = int(max(16 * 1024 * 1024,
                         min(cap - headroom, max(32 * 1024 * 1024, need))))

    def build(single_buffer_weights):
        # Constant-index weight blocks don't need double buffers; Buffered(1)
        # halves their VMEM footprint (matters on v7x's 64 MiB/TC).
        wmode = {"pipeline_mode": pl.Buffered(1)} if single_buffer_weights else {}
        return pl.pallas_call(
            kernel,
            out_shape=jax.ShapeDtypeStruct((b_pad, n_out), x.dtype),
            grid_spec=pltpu.PrefetchScalarGridSpec(
                num_scalar_prefetch=0,
                grid=grid,
                in_specs=[
                    # batch-tiled activations
                    pl.BlockSpec((tb, n_in), lambda i: (i, 0)),
                    # weights: constant index_map -> loaded once, VMEM-resident
                    pl.BlockSpec(w0.shape, lambda i: (0, 0), **wmode),
                    pl.BlockSpec(b0.shape, lambda i: (0, 0), **wmode),
                    pl.BlockSpec(wh.shape, lambda i: (0, 0, 0), **wmode),
                    pl.BlockSpec(bh.shape, lambda i: (0, 0, 0), **wmode),
                    pl.BlockSpec(we.shape, lambda i: (0, 0), **wmode),
                    pl.BlockSpec(be.shape, lambda i: (0, 0), **wmode),
                ],
                out_specs=pl.BlockSpec((tb, n_out), lambda i: (i, 0)),
            ),
            compiler_params=pltpu.CompilerParams(
                dimension_semantics=("parallel",),   # megacore split on v7x
                vmem_limit_bytes=vmem_limit,
            ),
        )

    try:
        out = build(True)(x, w0, b0, wh, bh, we, be)
    except Exception:
        # Fall back to default double-buffered pipelining if this JAX version
        # rejects single-buffered (Buffered(1)) block specs.
        out = build(False)(x, w0, b0, wh, bh, we, be)

    return out[:B]


def init_params(key, n_input, n_output, n_hidden, n_layers, dtype=jnp.float32):
    """PyTorch nn.Linear-style init: U(-1/sqrt(fan_in), 1/sqrt(fan_in))."""
    keys = jax.random.split(key, 6)

    def uni(k, shape, fan_in):
        bound = 1.0 / jnp.sqrt(jnp.asarray(fan_in, dtype))
        return jax.random.uniform(k, shape, dtype, minval=-bound, maxval=bound)

    return {
        "w0": uni(keys[0], (n_input, n_hidden), n_input),
        "b0": uni(keys[1], (1, n_hidden), n_input),
        "wh": uni(keys[2], (n_layers - 1, n_hidden, n_hidden), n_hidden),
        "bh": uni(keys[3], (n_layers - 1, 1, n_hidden), n_hidden),
        "we": uni(keys[4], (n_hidden, n_output), n_hidden),
        "be": uni(keys[5], (1, n_output), n_hidden),
    }


def fcn_reference(x, params):
    """Pure-JAX f32 reference for correctness check."""
    h = jnp.tanh(x @ params["w0"] + params["b0"])
    for i in range(params["wh"].shape[0]):
        h = jnp.tanh(h @ params["wh"][i] + params["bh"][i])
    return h @ params["we"] + params["be"]


if __name__ == "__main__":
    N_INPUT, N_OUTPUT, N_HIDDEN, N_LAYERS = 2, 1, 32, 3
    B = 8

    key = jax.random.PRNGKey(0)
    kx, kp = jax.random.split(key)
    x = jax.random.normal(kx, (B, N_INPUT), dtype=jnp.float32)
    params = init_params(kp, N_INPUT, N_OUTPUT, N_HIDDEN, N_LAYERS)

    prepared = prepare_params(params)
    out = fcn_forward(x, prepared)
    out = jax.block_until_ready(out)

    ref = fcn_reference(x, params)
    assert out.shape == (B, N_OUTPUT), out.shape
    # Weights are bf16 on the MXU (f32 accumulation, f32 tanh/bias), so compare
    # against the full-f32 reference with a tolerance covering bf16 rounding.
    assert jnp.allclose(out, ref, atol=3e-2, rtol=3e-2), \
        float(jnp.max(jnp.abs(out - ref)))

    print("KERNEL_OK")
</pallas_src>

<mosaic_0001>
module attributes {stable_mosaic.version = 11 : i64} {
  func.func @_fcn_kernel(%arg0: i32, %arg1: memref<8x2xf32, #tpu.memory_space<vmem>>, %arg2: memref<2x128xbf16, #tpu.memory_space<vmem>>, %arg3: memref<1x128xf32, #tpu.memory_space<vmem>>, %arg4: memref<2x128x128xbf16, #tpu.memory_space<vmem>>, %arg5: memref<2x1x128xf32, #tpu.memory_space<vmem>>, %arg6: memref<128x128xbf16, #tpu.memory_space<vmem>>, %arg7: memref<1x128xf32, #tpu.memory_space<vmem>>, %arg8: memref<8x1xf32, #tpu.memory_space<vmem>>) attributes {dimension_semantics = [#tpu.dimension_semantics<parallel>], iteration_bounds = array<i64: 1>, scalar_prefetch = 0 : i64, scratch_operands = 0 : i64, tpu.core_type = #tpu.core_type<tc>, window_params = [{transform_indices = @transform_0, window_bounds = array<i64: 8, 2>}, {pipeline_mode = #tpu.pipeline_mode<synchronous>, transform_indices = @transform_1, window_bounds = array<i64: 2, 128>}, {pipeline_mode = #tpu.pipeline_mode<synchronous>, transform_indices = @transform_2, window_bounds = array<i64: 1, 128>}, {pipeline_mode = #tpu.pipeline_mode<synchronous>, transform_indices = @transform_3, window_bounds = array<i64: 2, 128, 128>}, {pipeline_mode = #tpu.pipeline_mode<synchronous>, transform_indices = @transform_4, window_bounds = array<i64: 2, 1, 128>}, {pipeline_mode = #tpu.pipeline_mode<synchronous>, transform_indices = @transform_5, window_bounds = array<i64: 128, 128>}, {pipeline_mode = #tpu.pipeline_mode<synchronous>, transform_indices = @transform_6, window_bounds = array<i64: 1, 128>}, {transform_indices = @transform_7, window_bounds = array<i64: 8, 1>}]} {
    %c0 = arith.constant 0 : index
    %c0_0 = arith.constant 0 : index
    %0 = vector.load %arg1[%c0, %c0_0] : memref<8x2xf32, #tpu.memory_space<vmem>>, vector<8x2xf32>
    %c0_1 = arith.constant 0 : index
    %c0_2 = arith.constant 0 : index
    %1 = vector.load %arg2[%c0_1, %c0_2] : memref<2x128xbf16, #tpu.memory_space<vmem>>, vector<2x128xbf16>
    %2 = arith.extf %1 : vector<2x128xbf16> to vector<2x128xf32>
    %c0_3 = arith.constant 0 : index
    %c0_4 = arith.constant 0 : index
    %3 = vector.load %arg3[%c0_3, %c0_4] : memref<1x128xf32, #tpu.memory_space<vmem>>, vector<1x128xf32>
    %4 = vector.extract_strided_slice %0 {offsets = [0, 0], sizes = [8, 1], strides = [1, 1]} : vector<8x2xf32> to vector<8x1xf32>
    %5 = vector.extract_strided_slice %2 {offsets = [0, 0], sizes = [1, 128], strides = [1, 1]} : vector<2x128xf32> to vector<1x128xf32>
    %6 = vector.broadcast %4 : vector<8x1xf32> to vector<8x128xf32>
    %7 = vector.broadcast %5 : vector<1x128xf32> to vector<8x128xf32>
    %8 = arith.mulf %6, %7 : vector<8x128xf32>
    %9 = vector.broadcast %3 : vector<1x128xf32> to vector<8x128xf32>
    %10 = arith.addf %9, %8 : vector<8x128xf32>
    %11 = vector.extract_strided_slice %0 {offsets = [0, 1], sizes = [8, 1], strides = [1, 1]} : vector<8x2xf32> to vector<8x1xf32>
    %12 = vector.extract_strided_slice %2 {offsets = [1, 0], sizes = [1, 128], strides = [1, 1]} : vector<2x128xf32> to vector<1x128xf32>
    %13 = vector.broadcast %11 : vector<8x1xf32> to vector<8x128xf32>
    %14 = vector.broadcast %12 : vector<1x128xf32> to vector<8x128xf32>
    %15 = arith.mulf %13, %14 : vector<8x128xf32>
    %16 = arith.addf %10, %15 : vector<8x128xf32>
    %17 = math.tanh %16 : vector<8x128xf32>
    %c0_5 = arith.constant 0 : index
    %c0_6 = arith.constant 0 : index
    %c0_7 = arith.constant 0 : index
    %18 = vector.load %arg4[%c0_5, %c0_6, %c0_7] : memref<2x128x128xbf16, #tpu.memory_space<vmem>>, vector<1x128x128xbf16>
    %19 = vector.shape_cast %18 : vector<1x128x128xbf16> to vector<128x128xbf16>
    %c0_8 = arith.constant 0 : index
    %c0_9 = arith.constant 0 : index
    %c0_10 = arith.constant 0 : index
    %20 = vector.load %arg5[%c0_8, %c0_9, %c0_10] : memref<2x1x128xf32, #tpu.memory_space<vmem>>, vector<1x1x128xf32>
    %21 = vector.shape_cast %20 : vector<1x1x128xf32> to vector<1x128xf32>
    %22 = arith.truncf %17 : vector<8x128xf32> to vector<8x128xbf16>
    %cst = arith.constant dense<0.000000e+00> : vector<8x128xf32>
    %23 = tpu.matmul %22, %19, %cst {dimension_numbers = #tpu.dot_dimension_numbers<[1], [0], [0], [1], [0, 0, 1, 1], [], []>} : vector<8x128xbf16>, vector<128x128xbf16>, vector<8x128xf32> -> vector<8x128xf32>
    %24 = vector.broadcast %21 : vector<1x128xf32> to vector<8x128xf32>
    %25 = arith.addf %23, %24 : vector<8x128xf32>
    %26 = math.tanh %25 : vector<8x128xf32>
    %c1 = arith.constant 1 : index
    %c0_11 = arith.constant 0 : index
    %c0_12 = arith.constant 0 : index
    %27 = vector.load %arg4[%c1, %c0_11, %c0_12] : memref<2x128x128xbf16, #tpu.memory_space<vmem>>, vector<1x128x128xbf16>
    %28 = vector.shape_cast %27 : vector<1x128x128xbf16> to vector<128x128xbf16>
    %c1_13 = arith.constant 1 : index
    %c0_14 = arith.constant 0 : index
    %c0_15 = arith.constant 0 : index
    %29 = vector.load %arg5[%c1_13, %c0_14, %c0_15] : memref<2x1x128xf32, #tpu.memory_space<vmem>>, vector<1x1x128xf32>
    %30 = vector.shape_cast %29 : vector<1x1x128xf32> to vector<1x128xf32>
    %31 = arith.truncf %26 : vector<8x128xf32> to vector<8x128xbf16>
    %cst_16 = arith.constant dense<0.000000e+00> : vector<8x128xf32>
    %32 = tpu.matmul %31, %28, %cst_16 {dimension_numbers = #tpu.dot_dimension_numbers<[1], [0], [0], [1], [0, 0, 1, 1], [], []>} : vector<8x128xbf16>, vector<128x128xbf16>, vector<8x128xf32> -> vector<8x128xf32>
    %33 = vector.broadcast %30 : vector<1x128xf32> to vector<8x128xf32>
    %34 = arith.addf %32, %33 : vector<8x128xf32>
    %35 = math.tanh %34 : vector<8x128xf32>
    %36 = arith.truncf %35 : vector<8x128xf32> to vector<8x128xbf16>
    %c0_17 = arith.constant 0 : index
    %c0_18 = arith.constant 0 : index
    %37 = vector.load %arg6[%c0_17, %c0_18] : memref<128x128xbf16, #tpu.memory_space<vmem>>, vector<128x128xbf16>
    %cst_19 = arith.constant dense<0.000000e+00> : vector<8x128xf32>
    %38 = tpu.matmul %36, %37, %cst_19 {dimension_numbers = #tpu.dot_dimension_numbers<[1], [0], [0], [1], [0, 0, 1, 1], [], []>} : vector<8x128xbf16>, vector<128x128xbf16>, vector<8x128xf32> -> vector<8x128xf32>
    %c0_20 = arith.constant 0 : index
    %c0_21 = arith.constant 0 : index
    %39 = vector.load %arg7[%c0_20, %c0_21] : memref<1x128xf32, #tpu.memory_space<vmem>>, vector<1x128xf32>
    %40 = vector.broadcast %39 : vector<1x128xf32> to vector<8x128xf32>
    %41 = arith.addf %38, %40 : vector<8x128xf32>
    %42 = vector.extract_strided_slice %41 {offsets = [0, 0], sizes = [8, 1], strides = [1, 1]} : vector<8x128xf32> to vector<8x1xf32>
    %c0_22 = arith.constant 0 : index
    %c0_23 = arith.constant 0 : index
    %43 = vector.load %arg8[%c0_22, %c0_23] : memref<8x1xf32, #tpu.memory_space<vmem>>, vector<8x1xf32>
    tpu.vector_store %arg8[%c0_22, %c0_23], %42 {strides = array<i32>} : memref<8x1xf32, #tpu.memory_space<vmem>>, vector<8x1xf32>,
    return
  }
  func.func @transform_0(%arg0: i32) -> (i32, i32) {
    %c0_i32 = arith.constant 0 : i32
    %c0_i32_0 = arith.constant 0 : i32
    return %arg0, %c0_i32 : i32, i32
  }
  func.func @transform_1(%arg0: i32) -> (i32, i32) {
    %c0_i32 = arith.constant 0 : i32
    %c0_i32_0 = arith.constant 0 : i32
    %c0_i32_1 = arith.constant 0 : i32
    return %c0_i32, %c0_i32_0 : i32, i32
  }
  func.func @transform_2(%arg0: i32) -> (i32, i32) {
    %c0_i32 = arith.constant 0 : i32
    %c0_i32_0 = arith.constant 0 : i32
    %c0_i32_1 = arith.constant 0 : i32
    return %c0_i32, %c0_i32_0 : i32, i32
  }
  func.func @transform_3(%arg0: i32) -> (i32, i32, i32) {
    %c0_i32 = arith.constant 0 : i32
    %c0_i32_0 = arith.constant 0 : i32
    %c0_i32_1 = arith.constant 0 : i32
    %c0_i32_2 = arith.constant 0 : i32
    return %c0_i32, %c0_i32_0, %c0_i32_1 : i32, i32, i32
  }
  func.func @transform_4(%arg0: i32) -> (i32, i32, i32) {
    %c0_i32 = arith.constant 0 : i32
    %c0_i32_0 = arith.constant 0 : i32
    %c0_i32_1 = arith.constant 0 : i32
    %c0_i32_2 = arith.constant 0 : i32
    return %c0_i32, %c0_i32_0, %c0_i32_1 : i32, i32, i32
  }
  func.func @transform_5(%arg0: i32) -> (i32, i32) {
    %c0_i32 = arith.constant 0 : i32
    %c0_i32_0 = arith.constant 0 : i32
    %c0_i32_1 = arith.constant 0 : i32
    return %c0_i32, %c0_i32_0 : i32, i32
  }
  func.func @transform_6(%arg0: i32) -> (i32, i32) {
    %c0_i32 = arith.constant 0 : i32
    %c0_i32_0 = arith.constant 0 : i32
    %c0_i32_1 = arith.constant 0 : i32
    return %c0_i32, %c0_i32_0 : i32, i32
  }
  func.func @transform_7(%arg0: i32) -> (i32, i32) {
    %c0_i32 = arith.constant 0 : i32
    %c0_i32_0 = arith.constant 0 : i32
    return %arg0, %c0_i32 : i32, i32
  }
}

module attributes {stable_mosaic.version = 11 : i64} {
  func.func @_fcn_kernel(%arg0: i32, %arg1: memref<8x2xf32, #tpu.memory_space<vmem>>, %arg2: memref<2x128xbf16, #tpu.memory_space<vmem>>, %arg3: memref<1x128xf32, #tpu.memory_space<vmem>>, %arg4: memref<2x128x128xbf16, #tpu.memory_space<vmem>>, %arg5: memref<2x1x128xf32, #tpu.memory_space<vmem>>, %arg6: memref<128x128xbf16, #tpu.memory_space<vmem>>, %arg7: memref<1x128xf32, #tpu.memory_space<vmem>>, %arg8: memref<8x1xf32, #tpu.memory_space<vmem>>) attributes {dimension_semantics = [#tpu.dimension_semantics<parallel>], iteration_bounds = array<i64: 1>, scalar_prefetch = 0 : i64, scratch_operands = 0 : i64, tpu.core_type = #tpu.core_type<tc>, window_params = [{transform_indices = @transform_0, window_bounds = array<i64: 8, 2>}, {pipeline_mode = #tpu.pipeline_mode<synchronous>, transform_indices = @transform_1, window_bounds = array<i64: 2, 128>}, {pipeline_mode = #tpu.pipeline_mode<synchronous>, transform_indices = @transform_2, window_bounds = array<i64: 1, 128>}, {pipeline_mode = #tpu.pipeline_mode<synchronous>, transform_indices = @transform_3, window_bounds = array<i64: 2, 128, 128>}, {pipeline_mode = #tpu.pipeline_mode<synchronous>, transform_indices = @transform_4, window_bounds = array<i64: 2, 1, 128>}, {pipeline_mode = #tpu.pipeline_mode<synchronous>, transform_indices = @transform_5, window_bounds = array<i64: 128, 128>}, {pipeline_mode = #tpu.pipeline_mode<synchronous>, transform_indices = @transform_6, window_bounds = array<i64: 1, 128>}, {transform_indices = @transform_7, window_bounds = array<i64: 8, 1>}]} {
    %c0 = arith.constant 0 : index
    %c0_0 = arith.constant 0 : index
    %0 = vector.load %arg1[%c0, %c0_0] : memref<8x2xf32, #tpu.memory_space<vmem>>, vector<8x2xf32>
    %c0_1 = arith.constant 0 : index
    %c0_2 = arith.constant 0 : index
    %1 = vector.load %arg2[%c0_1, %c0_2] : memref<2x128xbf16, #tpu.memory_space<vmem>>, vector<2x128xbf16>
    %2 = arith.extf %1 : vector<2x128xbf16> to vector<2x128xf32>
    %c0_3 = arith.constant 0 : index
    %c0_4 = arith.constant 0 : index
    %3 = vector.load %arg3[%c0_3, %c0_4] : memref<1x128xf32, #tpu.memory_space<vmem>>, vector<1x128xf32>
    %4 = vector.extract_strided_slice %0 {offsets = [0, 0], sizes = [8, 1], strides = [1, 1]} : vector<8x2xf32> to vector<8x1xf32>
    %5 = vector.extract_strided_slice %2 {offsets = [0, 0], sizes = [1, 128], strides = [1, 1]} : vector<2x128xf32> to vector<1x128xf32>
    %6 = vector.broadcast %4 : vector<8x1xf32> to vector<8x128xf32>
    %7 = vector.broadcast %5 : vector<1x128xf32> to vector<8x128xf32>
    %8 = arith.mulf %6, %7 : vector<8x128xf32>
    %9 = vector.broadcast %3 : vector<1x128xf32> to vector<8x128xf32>
    %10 = arith.addf %9, %8 : vector<8x128xf32>
    %11 = vector.extract_strided_slice %0 {offsets = [0, 1], sizes = [8, 1], strides = [1, 1]} : vector<8x2xf32> to vector<8x1xf32>
    %12 = vector.extract_strided_slice %2 {offsets = [1, 0], sizes = [1, 128], strides = [1, 1]} : vector<2x128xf32> to vector<1x128xf32>
    %13 = vector.broadcast %11 : vector<8x1xf32> to vector<8x128xf32>
    %14 = vector.broadcast %12 : vector<1x128xf32> to vector<8x128xf32>
    %15 = arith.mulf %13, %14 : vector<8x128xf32>
    %16 = arith.addf %10, %15 : vector<8x128xf32>
    %17 = math.tanh %16 : vector<8x128xf32>
    %c0_5 = arith.constant 0 : index
    %c0_6 = arith.constant 0 : index
    %c0_7 = arith.constant 0 : index
    %18 = vector.load %arg4[%c0_5, %c0_6, %c0_7] : memref<2x128x128xbf16, #tpu.memory_space<vmem>>, vector<1x128x128xbf16>
    %19 = vector.shape_cast %18 : vector<1x128x128xbf16> to vector<128x128xbf16>
    %c0_8 = arith.constant 0 : index
    %c0_9 = arith.constant 0 : index
    %c0_10 = arith.constant 0 : index
    %20 = vector.load %arg5[%c0_8, %c0_9, %c0_10] : memref<2x1x128xf32, #tpu.memory_space<vmem>>, vector<1x1x128xf32>
    %21 = vector.shape_cast %20 : vector<1x1x128xf32> to vector<1x128xf32>
    %22 = arith.truncf %17 : vector<8x128xf32> to vector<8x128xbf16>
    %cst = arith.constant dense<0.000000e+00> : vector<8x128xf32>
    %23 = tpu.matmul %22, %19, %cst {dimension_numbers = #tpu.dot_dimension_numbers<[1], [0], [0], [1], [0, 0, 1, 1], [], []>} : vector<8x128xbf16>, vector<128x128xbf16>, vector<8x128xf32> -> vector<8x128xf32>
    %24 = vector.broadcast %21 : vector<1x128xf32> to vector<8x128xf32>
    %25 = arith.addf %23, %24 : vector<8x128xf32>
    %26 = math.tanh %25 : vector<8x128xf32>
    %c1 = arith.constant 1 : index
    %c0_11 = arith.constant 0 : index
    %c0_12 = arith.constant 0 : index
    %27 = vector.load %arg4[%c1, %c0_11, %c0_12] : memref<2x128x128xbf16, #tpu.memory_space<vmem>>, vector<1x128x128xbf16>
    %28 = vector.shape_cast %27 : vector<1x128x128xbf16> to vector<128x128xbf16>
    %c1_13 = arith.constant 1 : index
    %c0_14 = arith.constant 0 : index
    %c0_15 = arith.constant 0 : index
    %29 = vector.load %arg5[%c1_13, %c0_14, %c0_15] : memref<2x1x128xf32, #tpu.memory_space<vmem>>, vector<1x1x128xf32>
    %30 = vector.shape_cast %29 : vector<1x1x128xf32> to vector<1x128xf32>
    %31 = arith.truncf %26 : vector<8x128xf32> to vector<8x128xbf16>
    %cst_16 = arith.constant dense<0.000000e+00> : vector<8x128xf32>
    %32 = tpu.matmul %31, %28, %cst_16 {dimension_numbers = #tpu.dot_dimension_numbers<[1], [0], [0], [1], [0, 0, 1, 1], [], []>} : vector<8x128xbf16>, vector<128x128xbf16>, vector<8x128xf32> -> vector<8x128xf32>
    %33 = vector.broadcast %30 : vector<1x128xf32> to vector<8x128xf32>
    %34 = arith.addf %32, %33 : vector<8x128xf32>
    %35 = math.tanh %34 : vector<8x128xf32>
    %36 = arith.truncf %35 : vector<8x128xf32> to vector<8x128xbf16>
    %c0_17 = arith.constant 0 : index
    %c0_18 = arith.constant 0 : index
    %37 = vector.load %arg6[%c0_17, %c0_18] : memref<128x128xbf16, #tpu.memory_space<vmem>>, vector<128x128xbf16>
    %cst_19 = arith.constant dense<0.000000e+00> : vector<8x128xf32>
    %38 = tpu.matmul %36, %37, %cst_19 {dimension_numbers = #tpu.dot_dimension_numbers<[1], [0], [0], [1], [0, 0, 1, 1], [], []>} : vector<8x128xbf16>, vector<128x128xbf16>, vector<8x128xf32> -> vector<8x128xf32>
    %c0_20 = arith.constant 0 : index
    %c0_21 = arith.constant 0 : index
    %39 = vector.load %arg7[%c0_20, %c0_21] : memref<1x128xf32, #tpu.memory_space<vmem>>, vector<1x128xf32>
    %40 = vector.broadcast %39 : vector<1x128xf32> to vector<8x128xf32>
    %41 = arith.addf %38, %40 : vector<8x128xf32>
    %42 = vector.extract_strided_slice %41 {offsets = [0, 0], sizes = [8, 1], strides = [1, 1]} : vector<8x128xf32> to vector<8x1xf32>
    %c0_22 = arith.constant 0 : index
    %c0_23 = arith.constant 0 : index
    %43 = vector.load %arg8[%c0_22, %c0_23] : memref<8x1xf32, #tpu.memory_space<vmem>>, vector<8x1xf32>
    tpu.vector_store %arg8[%c0_22, %c0_23], %42 {strides = array<i32>} : memref<8x1xf32, #tpu.memory_space<vmem>>, vector<8x1xf32>,
    return
  }
  func.func @transform_0(%arg0: i32) -> (i32, i32) {
    %c0_i32 = arith.constant 0 : i32
    %c0_i32_0 = arith.constant 0 : i32
    return %arg0, %c0_i32 : i32, i32
  }
  func.func @transform_1(%arg0: i32) -> (i32, i32) {
    %c0_i32 = arith.constant 0 : i32
    %c0_i32_0 = arith.constant 0 : i32
    %c0_i32_1 = arith.constant 0 : i32
    return %c0_i32, %c0_i32_0 : i32, i32
  }
  func.func @transform_2(%arg0: i32) -> (i32, i32) {
    %c0_i32 = arith.constant 0 : i32
    %c0_i32_0 = arith.constant 0 : i32
    %c0_i32_1 = arith.constant 0 : i32
    return %c0_i32, %c0_i32_0 : i32, i32
  }
  func.func @transform_3(%arg0: i32) -> (i32, i32, i32) {
    %c0_i32 = arith.constant 0 : i32
    %c0_i32_0 = arith.constant 0 : i32
    %c0_i32_1 = arith.constant 0 : i32
    %c0_i32_2 = arith.constant 0 : i32
    return %c0_i32, %c0_i32_0, %c0_i32_1 : i32, i32, i32
  }
  func.func @transform_4(%arg0: i32) -> (i32, i32, i32) {
    %c0_i32 = arith.constant 0 : i32
    %c0_i32_0 = arith.constant 0 : i32
    %c0_i32_1 = arith.constant 0 : i32
    %c0_i32_2 = arith.constant 0 : i32
    return %c0_i32, %c0_i32_0, %c0_i32_1 : i32, i32, i32
  }
  func.func @transform_5(%arg0: i32) -> (i32, i32) {
    %c0_i32 = arith.constant 0 : i32
    %c0_i32_0 = arith.constant 0 : i32
    %c0_i32_1 = arith.constant 0 : i32
    return %c0_i32, %c0_i32_0 : i32, i32
  }
  func.func @transform_6(%arg0: i32) -> (i32, i32) {
    %c0_i32 = arith.constant 0 : i32
    %c0_i32_0 = arith.constant 0 : i32
    %c0_i32_1 = arith.constant 0 : i32
    return %c0_i32, %c0_i32_0 : i32, i32
  }
  func.func @transform_7(%arg0: i32) -> (i32, i32) {
    %c0_i32 = arith.constant 0 : i32
    %c0_i32_0 = arith.constant 0 : i32
    return %arg0, %c0_i32 : i32, i32
  }
}

</mosaic_0001>

<llo_original>
// kernel: tpu_custom_call.1
$region0: #{tpu_custom_call.1}
  #allocation0 [shape = 'u32[]', space=smem, size = 0x4, offset = 0x4, fixed_abs, tag = 'smem constant byte address 0x4 - core index']
  #allocation1 [shape = 'u32[144,128]{1,0:T(1,128)}', space=vmem, size = 0x12000, scoped, tag = 'internal scratch']
  %s0 = inlined_call_operand.vmem [shape: f32[8,2], index: 0, kind: input, shape index: {}]
  %s1 = inlined_call_operand.vmem [shape: bf16[2,128], index: 1, kind: input, shape index: {}]
  %s2 = inlined_call_operand.vmem [shape: f32[1,128], index: 2, kind: input, shape index: {}]
  %s3 = inlined_call_operand.hbm [shape: bf16[2,128,128], index: 3, kind: input, shape index: {}]
  %s4 = inlined_call_operand.vmem [shape: f32[2,1,128], index: 4, kind: input, shape index: {}]
  %s5 = inlined_call_operand.hbm [shape: bf16[128,128], index: 5, kind: input, shape index: {}]
  %s6 = inlined_call_operand.vmem [shape: f32[1,128], index: 6, kind: input, shape index: {}]
  %s7 = inlined_call_operand.vmem [shape: f32[8,1], index: 7, kind: output, shape index: {}]
  %s8 = sld [smem:[#allocation0]]
  $region46: #{tpu_custom_call.1} parent=0
    _
  %s10 = ssub.s32 1, %s8
  %s11 = scalar_select 0, %s10, %s8
  $region1: #{tpu_custom_call.1} parent=0
    #allocation2 [shape = 'u8[65536]{0}', space=vmem, size = 0x10000, scoped, tag = 'input window, operand 3, single buffered']
    #allocation3 [shape = 's32[1]{0}', space=sflag, size = 0x4, scoped, tag = 'scoped memory for tpu_custom_call.1']
    #allocation4 [shape = 'u8[32768]{0}', space=vmem, size = 0x8000, scoped, tag = 'input window, operand 5, single buffered']
    #allocation5 [shape = 's32[1]{0}', space=sflag, size = 0x4, scoped, tag = 'scoped memory for tpu_custom_call.1']
    %12 = vsyncpa [#allocation3], 0
    %13 = vsyncpa [#allocation5], 0
    // Predicated region
    $region2: #{tpu_custom_call.1} parent=1 // pred_check
      _
    $region3: #{tpu_custom_call.1} parent=1 // pred_check_branch
      %15 = sbr.rel (0) target = $region5
    $region4: #{tpu_custom_call.1} parent=1 // pred_region
      _
    $region5: #{tpu_custom_call.1} parent=1 // pred_fallthru
      _
    // Predicated region
    $region6: #{tpu_custom_call.1} parent=1 // pred_check
      _
    $region7: #{tpu_custom_call.1} parent=1 // pred_check_branch
      %17 = sbr.rel (0) target = $region9
    $region8: #{tpu_custom_call.1} parent=1 // pred_region
      _
    $region9: #{tpu_custom_call.1} parent=1 // pred_fallthru
      _
    // Predicated region
    $region10: #{tpu_custom_call.1} parent=1 // pred_check
      _
    $region11: #{tpu_custom_call.1} parent=1 // pred_check_branch
      %19 = sbr.rel (0) target = $region13
    $region12: #{tpu_custom_call.1} parent=1 // pred_region
      _
    $region13: #{tpu_custom_call.1} parent=1 // pred_fallthru
      _
    // Predicated region
    $region14: #{tpu_custom_call.1} parent=1 // pred_check
      _
    $region15: #{tpu_custom_call.1} parent=1 // pred_check_branch
      %21 = sbr.rel (0) target = $region17
    $region16: #{tpu_custom_call.1} parent=1 // pred_region
      %s23 = ssub.s32 2048, 2048
      %24 = vsyncadd [#allocation3], %s23
      %s25 = sshll.u32 [#allocation2], 4
      %s26 = int_to_ptr.vmem [resolvable:$true] %s25
      %31 = dma.hbm_to_vmem [thread:$0]  %s3, 2048, %s26, [#allocation3], 64, 64, 4
    $region17: #{tpu_custom_call.1} parent=1 // pred_fallthru
      _
    // Predicated region
    $region18: #{tpu_custom_call.1} parent=1 // pred_check
      _
    $region19: #{tpu_custom_call.1} parent=1 // pred_check_branch
      %33 = sbr.rel (0) target = $region21
    $region20: #{tpu_custom_call.1} parent=1 // pred_region
      _
    $region21: #{tpu_custom_call.1} parent=1 // pred_fallthru
      _
    // Predicated region
    $region22: #{tpu_custom_call.1} parent=1 // pred_check
      _
    $region23: #{tpu_custom_call.1} parent=1 // pred_check_branch
      %35 = sbr.rel (0) target = $region25
    $region24: #{tpu_custom_call.1} parent=1 // pred_region
      %s37 = ssub.s32 1024, 1024
      %38 = vsyncadd [#allocation5], %s37
      %s39 = sshll.u32 [#allocation4], 4
      %s40 = int_to_ptr.vmem [resolvable:$true] %s39
      %45 = dma.hbm_to_vmem [thread:$0]  %s5, 1024, %s40, [#allocation5], 64, 64, 4
    $region25: #{tpu_custom_call.1} parent=1 // pred_fallthru
      _
    // Predicated region
    $region26: #{tpu_custom_call.1} parent=1 // pred_check
      _
    $region27: #{tpu_custom_call.1} parent=1 // pred_check_branch
      %47 = sbr.rel (0) target = $region29
    $region28: #{tpu_custom_call.1} parent=1 // pred_region
      _
    $region29: #{tpu_custom_call.1} parent=1 // pred_fallthru
      _
    // Predicated region
    $region30: #{tpu_custom_call.1} parent=1 // pred_check
      _
    $region31: #{tpu_custom_call.1} parent=1 // pred_check_branch
      %49 = sbr.rel (0) target = $region33
    $region32: #{tpu_custom_call.1} parent=1 // pred_region
      %50 = dma.done [#allocation3], 2048
    $region33: #{tpu_custom_call.1} parent=1 // pred_fallthru
      _
    // Predicated region
    $region34: #{tpu_custom_call.1} parent=1 // pred_check
      _
    $region35: #{tpu_custom_call.1} parent=1 // pred_check_branch
      %52 = sbr.rel (0) target = $region37
    $region36: #{tpu_custom_call.1} parent=1 // pred_region
      %53 = dma.done [#allocation5], 1024
    $region37: #{tpu_custom_call.1} parent=1 // pred_fallthru
      _
    %v55 = vld [vmem:[%s0] sm:$0xff]
    %v56 = vld [vmem:[%s1] sm:$0x1]
    %v57 = vunpack.c.l.bf16 %v56
    %v58 = vld [vmem:[%s2] sm:$0x1]
    %60 = vset.pattern.permute.xlu0 0
    %61 = vperm.xlu0 %60, %v55
    %v62 = vpop.permute.xlu0 %61
    %v64 = vlaneseq
    %v65 = vshrl.u32 %v64, 7
    %v66 = vsub.s32 0, %v65
    %v67 = vrot.slane %v57, %v66
    %v68 = vmul.f32 %v62, %v67
    %v70 = vlaneseq
    %v71 = vshrl.u32 %v70, 7
    %v72 = vsub.s32 0, %v71
    %v73 = vrot.slane %v58, %v72
    %v75 = vadd.f32 %v73, %v68
    %76 = vset.pattern.permute.xlu0 1
    %77 = vperm.xlu0 %76, %v55
    %v78 = vpop.permute.xlu0 %77
    %v80 = vlaneseq
    %v81 = vshrl.u32 %v80, 7
    %v82 = vsub.s32 1, %v81
    %v83 = vrot.slane %v57, %v82
    %v84 = vmul.f32 %v78, %v83
    %v85 = vadd.f32 %v75, %v84
    %v86 = vtanh.pop %v85
    %v87 = vld [vmem:[#allocation2] sm:$0xf]
    %v88 = vld [vmem:[#allocation2 + $0x4] sm:$0xf]
    %v89 = vld [vmem:[#allocation2 + $0x8] sm:$0xf]
    %v90 = vld [vmem:[#allocation2 + $0xc] sm:$0xf]
    %v91 = vld [vmem:[#allocation2 + $0x10] sm:$0xf]
    %v92 = vld [vmem:[#allocation2 + $0x14] sm:$0xf]
    %v93 = vld [vmem:[#allocation2 + $0x18] sm:$0xf]
    %v94 = vld [vmem:[#allocation2 + $0x1c] sm:$0xf]
    %v95 = vld [vmem:[#allocation2 + $0x20] sm:$0xf]
    %v96 = vld [vmem:[#allocation2 + $0x24] sm:$0xf]
    %v97 = vld [vmem:[#allocation2 + $0x28] sm:$0xf]
    %v98 = vld [vmem:[#allocation2 + $0x2c] sm:$0xf]
    %v99 = vld [vmem:[#allocation2 + $0x30] sm:$0xf]
    %v100 = vld [vmem:[#allocation2 + $0x34] sm:$0xf]
    %v101 = vld [vmem:[#allocation2 + $0x38] sm:$0xf]
    %v102 = vld [vmem:[#allocation2 + $0x3c] sm:$0xf]
    %v103 = vld [vmem:[%s4] sm:$0x1]
    %v104 = vpack.c.bf16 %v86, %v86
    %v106 = vlaneseq
    %v107 = vshrl.u32 %v106, 7
    %v108 = vsub.s32 0, %v107
    %v109 = vrot.slane %v103, %v108
    %v127 = vunpack.c.l.b16 %v87
    %v128 = vunpack.c.l.b16 %v88
    %v129 = vunpack.c.l.b16 %v89
    %v130 = vunpack.c.l.b16 %v90
    %v131 = vunpack.c.l.b16 %v91
    %v132 = vunpack.c.l.b16 %v92
    %v133 = vunpack.c.l.b16 %v93
    %v134 = vunpack.c.l.b16 %v94
    %v135 = vunpack.c.l.b16 %v95
    %v136 = vunpack.c.l.b16 %v96
    %v137 = vunpack.c.l.b16 %v97
    %v138 = vunpack.c.l.b16 %v98
    %v139 = vunpack.c.l.b16 %v99
    %v140 = vunpack.c.l.b16 %v100
    %v141 = vunpack.c.l.b16 %v101
    %v142 = vunpack.c.l.b16 %v102
    %v143 = vpack.c.b16 %v128, %v127
    %v144 = vpack.c.b16 %v130, %v129
    %v145 = vpack.c.b16 %v132, %v131
    %v146 = vpack.c.b16 %v134, %v133
    %v147 = vpack.c.b16 %v136, %v135
    %v148 = vpack.c.b16 %v138, %v137
    %v149 = vpack.c.b16 %v140, %v139
    %v150 = vpack.c.b16 %v142, %v141
    %159 = vmatprep.subr.bf16.mxu0 0
    %160 = vmatpush1.bf16.msra.mxu0 %v143
    %161 = vmatprep.subr.bf16.mxu0 0
    %162 = vmatpush1.bf16.msra.mxu0 %v144
    %163 = vmatprep.subr.bf16.mxu0 0
    %164 = vmatpush1.bf16.msra.mxu0 %v145
    %165 = vmatprep.subr.bf16.mxu0 0
    %166 = vmatpush1.bf16.msra.mxu0 %v146
    %167 = vmatprep.subr.bf16.mxu0 0
    %168 = vmatpush1.bf16.msra.mxu0 %v147
    %169 = vmatprep.subr.bf16.mxu0 0
    %170 = vmatpush1.bf16.msra.mxu0 %v148
    %171 = vmatprep.subr.bf16.mxu0 0
    %172 = vmatpush1.bf16.msra.mxu0 %v149
    %173 = vmatprep.subr.bf16.mxu0 0
    %174 = vmatpush1.bf16.msra.mxu0 %v150
    %175 = vmatprep.subr.bf16.mxu0 0
    %176 = vmatpush1.bf16.msra.mxu0 0
    %177 = vmatprep.subr.bf16.mxu0 0
    %178 = vmatpush1.bf16.msra.mxu0 0
    %179 = vmatprep.subr.bf16.mxu0 0
    %180 = vmatpush1.bf16.msra.mxu0 0
    %181 = vmatprep.subr.bf16.mxu0 0
    %182 = vmatpush1.bf16.msra.mxu0 0
    %183 = vmatprep.subr.bf16.mxu0 0
    %184 = vmatpush1.bf16.msra.mxu0 0
    %185 = vmatprep.subr.bf16.mxu0 0
    %186 = vmatpush1.bf16.msra.mxu0 0
    %187 = vmatprep.subr.bf16.mxu0 0
    %188 = vmatpush1.bf16.msra.mxu0 0
    %189 = vmatprep.subr.bf16.mxu0 0
    %190 = vmatpush1.bf16.msra.mxu0 0
    %191 = vmatprep.mubr.bf16.mxu0 0
    %192 = vmatmul.mubr.bf16.gmra.mrb[0].mxu0 %v104
    %v193 = vpop.f32.mrb[0].mxu0
    %v194 = vadd.f32 %v109, %v193
    %v195 = vpop.f32.mrb[0].mxu0
    %v196 = vpop.f32.mrb[0].mxu0
    %v197 = vpop.f32.mrb[0].mxu0
    %198 = vdwg.mxu0
    %v199 = vtanh.pop %v194
    %s200 = scalar_lea.vmem [#allocation2], 64
    %v201 = vld [vmem:[%s200] sm:$0xf]
    %v202 = vld [vmem:[%s200 + $0x4] sm:$0xf]
    %v203 = vld [vmem:[%s200 + $0x8] sm:$0xf]
    %v204 = vld [vmem:[%s200 + $0xc] sm:$0xf]
    %v205 = vld [vmem:[%s200 + $0x10] sm:$0xf]
    %v206 = vld [vmem:[%s200 + $0x14] sm:$0xf]
    %v207 = vld [vmem:[%s200 + $0x18] sm:$0xf]
    %v208 = vld [vmem:[%s200 + $0x1c] sm:$0xf]
    %v209 = vld [vmem:[%s200 + $0x20] sm:$0xf]
    %v210 = vld [vmem:[%s200 + $0x24] sm:$0xf]
    %v211 = vld [vmem:[%s200 + $0x28] sm:$0xf]
    %v212 = vld [vmem:[%s200 + $0x2c] sm:$0xf]
    %v213 = vld [vmem:[%s200 + $0x30] sm:$0xf]
    %v214 = vld [vmem:[%s200 + $0x34] sm:$0xf]
    %v215 = vld [vmem:[%s200 + $0x38] sm:$0xf]
    %v216 = vld [vmem:[%s200 + $0x3c] sm:$0xf]
    %s217 = scalar_lea.vmem %s4, 1
    %v218 = vld [vmem:[%s217] sm:$0x1]
    %v219 = vpack.c.bf16 %v199, %v199
    %v221 = vlaneseq
    %v222 = vshrl.u32 %v221, 7
    %v223 = vsub.s32 0, %v222
    %v224 = vrot.slane %v218, %v223
    %v242 = vunpack.c.l.b16 %v201
    %v243 = vunpack.c.l.b16 %v202
    %v244 = vunpack.c.l.b16 %v203
    %v245 = vunpack.c.l.b16 %v204
    %v246 = vunpack.c.l.b16 %v205
    %v247 = vunpack.c.l.b16 %v206
    %v248 = vunpack.c.l.b16 %v207
    %v249 = vunpack.c.l.b16 %v208
    %v250 = vunpack.c.l.b16 %v209
    %v251 = vunpack.c.l.b16 %v210
    %v252 = vunpack.c.l.b16 %v211
    %v253 = vunpack.c.l.b16 %v212
    %v254 = vunpack.c.l.b16 %v213
    %v255 = vunpack.c.l.b16 %v214
    %v256 = vunpack.c.l.b16 %v215
    %v257 = vunpack.c.l.b16 %v216
    %v258 = vpack.c.b16 %v243, %v242
    %v259 = vpack.c.b16 %v245, %v244
    %v260 = vpack.c.b16 %v247, %v246
    %v261 = vpack.c.b16 %v249, %v248
    %v262 = vpack.c.b16 %v251, %v250
    %v263 = vpack.c.b16 %v253, %v252
    %v264 = vpack.c.b16 %v255, %v254
    %v265 = vpack.c.b16 %v257, %v256
    %274 = vmatprep.subr.bf16.mxu0 0
    %275 = vmatpush1.bf16.msra.mxu0 %v258
    %276 = vmatprep.subr.bf16.mxu0 0
    %277 = vmatpush1.bf16.msra.mxu0 %v259
    %278 = vmatprep.subr.bf16.mxu0 0
    %279 = vmatpush1.bf16.msra.mxu0 %v260
    %280 = vmatprep.subr.bf16.mxu0 0
    %281 = vmatpush1.bf16.msra.mxu0 %v261
    %282 = vmatprep.subr.bf16.mxu0 0
    %283 = vmatpush1.bf16.msra.mxu0 %v262
    %284 = vmatprep.subr.bf16.mxu0 0
    %285 = vmatpush1.bf16.msra.mxu0 %v263
    %286 = vmatprep.subr.bf16.mxu0 0
    %287 = vmatpush1.bf16.msra.mxu0 %v264
    %288 = vmatprep.subr.bf16.mxu0 0
    %289 = vmatpush1.bf16.msra.mxu0 %v265
    %290 = vmatprep.subr.bf16.mxu0 0
    %291 = vmatpush1.bf16.msra.mxu0 0
    %292 = vmatprep.subr.bf16.mxu0 0
    %293 = vmatpush1.bf16.msra.mxu0 0
    %294 = vmatprep.subr.bf16.mxu0 0
    %295 = vmatpush1.bf16.msra.mxu0 0
    %296 = vmatprep.subr.bf16.mxu0 0
    %297 = vmatpush1.bf16.msra.mxu0 0
    %298 = vmatprep.subr.bf16.mxu0 0
    %299 = vmatpush1.bf16.msra.mxu0 0
    %300 = vmatprep.subr.bf16.mxu0 0
    %301 = vmatpush1.bf16.msra.mxu0 0
    %302 = vmatprep.subr.bf16.mxu0 0
    %303 = vmatpush1.bf16.msra.mxu0 0
    %304 = vmatprep.subr.bf16.mxu0 0
    %305 = vmatpush1.bf16.msra.mxu0 0
    %306 = vmatprep.mubr.bf16.mxu0 0
    %307 = vmatmul.mubr.bf16.gmra.mrb[0].mxu0 %v219
    %v308 = vpop.f32.mrb[0].mxu0
    %v309 = vadd.f32 %v224, %v308
    %v310 = vpop.f32.mrb[0].mxu0
    %v311 = vpop.f32.mrb[0].mxu0
    %v312 = vpop.f32.mrb[0].mxu0
    %313 = vdwg.mxu0
    %v314 = vtanh.pop %v309
    %v315 = vpack.c.bf16 %v314, %v314
    %v316 = vld [vmem:[#allocation4] sm:$0xf]
    %v317 = vld [vmem:[#allocation4 + $0x4] sm:$0xf]
    %v318 = vld [vmem:[#allocation4 + $0x8] sm:$0xf]
    %v319 = vld [vmem:[#allocation4 + $0xc] sm:$0xf]
    %v320 = vld [vmem:[#allocation4 + $0x10] sm:$0xf]
    %v321 = vld [vmem:[#allocation4 + $0x14] sm:$0xf]
    %v322 = vld [vmem:[#allocation4 + $0x18] sm:$0xf]
    %v323 = vld [vmem:[#allocation4 + $0x1c] sm:$0xf]
    %v324 = vld [vmem:[#allocation4 + $0x20] sm:$0xf]
    %v325 = vld [vmem:[#allocation4 + $0x24] sm:$0xf]
    %v326 = vld [vmem:[#allocation4 + $0x28] sm:$0xf]
    %v327 = vld [vmem:[#allocation4 + $0x2c] sm:$0xf]
    %v328 = vld [vmem:[#allocation4 + $0x30] sm:$0xf]
    %v329 = vld [vmem:[#allocation4 + $0x34] sm:$0xf]
    %v330 = vld [vmem:[#allocation4 + $0x38] sm:$0xf]
    %v331 = vld [vmem:[#allocation4 + $0x3c] sm:$0xf]
    %v332 = vld [vmem:[%s6] sm:$0x1]
    %v334 = vlaneseq
    %v335 = vshrl.u32 %v334, 7
    %v336 = vsub.s32 0, %v335
    %v337 = vrot.slane %v332, %v336
    %v355 = vunpack.c.l.b16 %v316
    %v356 = vunpack.c.l.b16 %v317
    %v357 = vunpack.c.l.b16 %v318
    %v358 = vunpack.c.l.b16 %v319
    %v359 = vunpack.c.l.b16 %v320
    %v360 = vunpack.c.l.b16 %v321
    %v361 = vunpack.c.l.b16 %v322
    %v362 = vunpack.c.l.b16 %v323
    %v363 = vunpack.c.l.b16 %v324
    %v364 = vunpack.c.l.b16 %v325
    %v365 = vunpack.c.l.b16 %v326
    %v366 = vunpack.c.l.b16 %v327
    %v367 = vunpack.c.l.b16 %v328
    %v368 = vunpack.c.l.b16 %v329
    %v369 = vunpack.c.l.b16 %v330
    %v370 = vunpack.c.l.b16 %v331
    %v371 = vpack.c.b16 %v356, %v355
    %v372 = vpack.c.b16 %v358, %v357
    %v373 = vpack.c.b16 %v360, %v359
    %v374 = vpack.c.b16 %v362, %v361
    %v375 = vpack.c.b16 %v364, %v363
    %v376 = vpack.c.b16 %v366, %v365
    %v377 = vpack.c.b16 %v368, %v367
    %v378 = vpack.c.b16 %v370, %v369
    %387 = vmatprep.subr.bf16.mxu0 0
    %388 = vmatpush1.bf16.msra.mxu0 %v371
    %389 = vmatprep.subr.bf16.mxu0 0
    %390 = vmatpush1.bf16.msra.mxu0 %v372
    %391 = vmatprep.subr.bf16.mxu0 0
    %392 = vmatpush1.bf16.msra.mxu0 %v373
    %393 = vmatprep.subr.bf16.mxu0 0
    %394 = vmatpush1.bf16.msra.mxu0 %v374
    %395 = vmatprep.subr.bf16.mxu0 0
    %396 = vmatpush1.bf16.msra.mxu0 %v375
    %397 = vmatprep.subr.bf16.mxu0 0
    %398 = vmatpush1.bf16.msra.mxu0 %v376
    %399 = vmatprep.subr.bf16.mxu0 0
    %400 = vmatpush1.bf16.msra.mxu0 %v377
    %401 = vmatprep.subr.bf16.mxu0 0
    %402 = vmatpush1.bf16.msra.mxu0 %v378
    %403 = vmatprep.subr.bf16.mxu0 0
    %404 = vmatpush1.bf16.msra.mxu0 0
    %405 = vmatprep.subr.bf16.mxu0 0
    %406 = vmatpush1.bf16.msra.mxu0 0
    %407 = vmatprep.subr.bf16.mxu0 0
    %408 = vmatpush1.bf16.msra.mxu0 0
    %409 = vmatprep.subr.bf16.mxu0 0
    %410 = vmatpush1.bf16.msra.mxu0 0
    %411 = vmatprep.subr.bf16.mxu0 0
    %412 = vmatpush1.bf16.msra.mxu0 0
    %413 = vmatprep.subr.bf16.mxu0 0
    %414 = vmatpush1.bf16.msra.mxu0 0
    %415 = vmatprep.subr.bf16.mxu0 0
    %416 = vmatpush1.bf16.msra.mxu0 0
    %417 = vmatprep.subr.bf16.mxu0 0
    %418 = vmatpush1.bf16.msra.mxu0 0
    %419 = vmatprep.mubr.bf16.mxu0 0
    %420 = vmatmul.mubr.bf16.gmra.mrb[0].mxu0 %v315
    %v421 = vpop.f32.mrb[0].mxu0
    %v422 = vadd.f32 %v337, %v421
    %v423 = vpop.f32.mrb[0].mxu0
    %v424 = vpop.f32.mrb[0].mxu0
    %v425 = vpop.f32.mrb[0].mxu0
    %426 = vdwg.mxu0
    %vm427 = vcmask 7168
    %428 = vst.msk [vmem:[%s7] sm:$0xff] %vm427, %v422
    // Predicated region
    $region38: #{tpu_custom_call.1} parent=1 // pred_check
      _
    $region39: #{tpu_custom_call.1} parent=1 // pred_check_branch
      %430 = sbr.rel (0) target = $region41
    $region40: #{tpu_custom_call.1} parent=1 // pred_region
      _
    $region41: #{tpu_custom_call.1} parent=1 // pred_fallthru
      _
    // Predicated region
    $region42: #{tpu_custom_call.1} parent=1 // pred_check
      _
    $region43: #{tpu_custom_call.1} parent=1 // pred_check_branch
      %432 = sbr.rel (0) target = $region45
    $region44: #{tpu_custom_call.1} parent=1 // pred_region
      _
    $region45: #{tpu_custom_call.1} parent=1 // pred_fallthru
      _
    %433 = vsyncpa [#allocation3], 1
    %434 = vsyncpa [#allocation5], 1

// kernel: tpu_custom_call.1
$region0: #{tpu_custom_call.1}
  #allocation0 [shape = 'u32[]', space=smem, size = 0x4, offset = 0x4, fixed_abs, tag = 'smem constant byte address 0x4 - core index']
  #allocation1 [shape = 'u32[144,128]{1,0:T(1,128)}', space=vmem, size = 0x12000, scoped, tag = 'internal scratch']
  %s0 = inlined_call_operand.vmem [shape: f32[8,2], index: 0, kind: input, shape index: {}]
  %s1 = inlined_call_operand.vmem [shape: bf16[2,128], index: 1, kind: input, shape index: {}]
  %s2 = inlined_call_operand.vmem [shape: f32[1,128], index: 2, kind: input, shape index: {}]
  %s3 = inlined_call_operand.hbm [shape: bf16[2,128,128], index: 3, kind: input, shape index: {}]
  %s4 = inlined_call_operand.vmem [shape: f32[2,1,128], index: 4, kind: input, shape index: {}]
  %s5 = inlined_call_operand.hbm [shape: bf16[128,128], index: 5, kind: input, shape index: {}]
  %s6 = inlined_call_operand.vmem [shape: f32[1,128], index: 6, kind: input, shape index: {}]
  %s7 = inlined_call_operand.vmem [shape: f32[8,1], index: 7, kind: output, shape index: {}]
  %s8 = sld [smem:[#allocation0]]
  $region46: #{tpu_custom_call.1} parent=0
    _
  %s10 = ssub.s32 1, %s8
  %s11 = scalar_select 0, %s10, %s8
  $region1: #{tpu_custom_call.1} parent=0
    #allocation2 [shape = 'u8[65536]{0}', space=vmem, size = 0x10000, scoped, tag = 'input window, operand 3, single buffered']
    #allocation3 [shape = 's32[1]{0}', space=sflag, size = 0x4, scoped, tag = 'scoped memory for tpu_custom_call.1']
    #allocation4 [shape = 'u8[32768]{0}', space=vmem, size = 0x8000, scoped, tag = 'input window, operand 5, single buffered']
    #allocation5 [shape = 's32[1]{0}', space=sflag, size = 0x4, scoped, tag = 'scoped memory for tpu_custom_call.1']
    %12 = vsyncpa [#allocation3], 0
    %13 = vsyncpa [#allocation5], 0
    // Predicated region
    $region2: #{tpu_custom_call.1} parent=1 // pred_check
      _
    $region3: #{tpu_custom_call.1} parent=1 // pred_check_branch
      %15 = sbr.rel (0) target = $region5
    $region4: #{tpu_custom_call.1} parent=1 // pred_region
      _
    $region5: #{tpu_custom_call.1} parent=1 // pred_fallthru
      _
    // Predicated region
    $region6: #{tpu_custom_call.1} parent=1 // pred_check
      _
    $region7: #{tpu_custom_call.1} parent=1 // pred_check_branch
      %17 = sbr.rel (0) target = $region9
    $region8: #{tpu_custom_call.1} parent=1 // pred_region
      _
    $region9: #{tpu_custom_call.1} parent=1 // pred_fallthru
      _
    // Predicated region
    $region10: #{tpu_custom_call.1} parent=1 // pred_check
      _
    $region11: #{tpu_custom_call.1} parent=1 // pred_check_branch
      %19 = sbr.rel (0) target = $region13
    $region12: #{tpu_custom_call.1} parent=1 // pred_region
      _
    $region13: #{tpu_custom_call.1} parent=1 // pred_fallthru
      _
    // Predicated region
    $region14: #{tpu_custom_call.1} parent=1 // pred_check
      _
    $region15: #{tpu_custom_call.1} parent=1 // pred_check_branch
      %21 = sbr.rel (0) target = $region17
    $region16: #{tpu_custom_call.1} parent=1 // pred_region
      %s23 = ssub.s32 2048, 2048
      %24 = vsyncadd [#allocation3], %s23
      %s25 = sshll.u32 [#allocation2], 4
      %s26 = int_to_ptr.vmem [resolvable:$true] %s25
      %31 = dma.hbm_to_vmem [thread:$0]  %s3, 2048, %s26, [#allocation3], 64, 64, 4
    $region17: #{tpu_custom_call.1} parent=1 // pred_fallthru
      _
    // Predicated region
    $region18: #{tpu_custom_call.1} parent=1 // pred_check
      _
    $region19: #{tpu_custom_call.1} parent=1 // pred_check_branch
      %33 = sbr.rel (0) target = $region21
    $region20: #{tpu_custom_call.1} parent=1 // pred_region
      _
    $region21: #{tpu_custom_call.1} parent=1 // pred_fallthru
      _
    // Predicated region
    $region22: #{tpu_custom_call.1} parent=1 // pred_check
      _
    $region23: #{tpu_custom_call.1} parent=1 // pred_check_branch
      %35 = sbr.rel (0) target = $region25
    $region24: #{tpu_custom_call.1} parent=1 // pred_region
      %s37 = ssub.s32 1024, 1024
      %38 = vsyncadd [#allocation5], %s37
      %s39 = sshll.u32 [#allocation4], 4
      %s40 = int_to_ptr.vmem [resolvable:$true] %s39
      %45 = dma.hbm_to_vmem [thread:$0]  %s5, 1024, %s40, [#allocation5], 64, 64, 4
    $region25: #{tpu_custom_call.1} parent=1 // pred_fallthru
      _
    // Predicated region
    $region26: #{tpu_custom_call.1} parent=1 // pred_check
      _
    $region27: #{tpu_custom_call.1} parent=1 // pred_check_branch
      %47 = sbr.rel (0) target = $region29
    $region28: #{tpu_custom_call.1} parent=1 // pred_region
      _
    $region29: #{tpu_custom_call.1} parent=1 // pred_fallthru
      _
    // Predicated region
    $region30: #{tpu_custom_call.1} parent=1 // pred_check
      _
    $region31: #{tpu_custom_call.1} parent=1 // pred_check_branch
      %49 = sbr.rel (0) target = $region33
    $region32: #{tpu_custom_call.1} parent=1 // pred_region
      %50 = dma.done [#allocation3], 2048
    $region33: #{tpu_custom_call.1} parent=1 // pred_fallthru
      _
    // Predicated region
    $region34: #{tpu_custom_call.1} parent=1 // pred_check
      _
    $region35: #{tpu_custom_call.1} parent=1 // pred_check_branch
      %52 = sbr.rel (0) target = $region37
    $region36: #{tpu_custom_call.1} parent=1 // pred_region
      %53 = dma.done [#allocation5], 1024
    $region37: #{tpu_custom_call.1} parent=1 // pred_fallthru
      _
    %v55 = vld [vmem:[%s0] sm:$0xff]
    %v56 = vld [vmem:[%s1] sm:$0x1]
    %v57 = vunpack.c.l.bf16 %v56
    %v58 = vld [vmem:[%s2] sm:$0x1]
    %60 = vset.pattern.permute.xlu0 0
    %61 = vperm.xlu0 %60, %v55
    %v62 = vpop.permute.xlu0 %61
    %v64 = vlaneseq
    %v65 = vshrl.u32 %v64, 7
    %v66 = vsub.s32 0, %v65
    %v67 = vrot.slane %v57, %v66
    %v68 = vmul.f32 %v62, %v67
    %v70 = vlaneseq
    %v71 = vshrl.u32 %v70, 7
    %v72 = vsub.s32 0, %v71
    %v73 = vrot.slane %v58, %v72
    %v75 = vadd.f32 %v73, %v68
    %76 = vset.pattern.permute.xlu0 1
    %77 = vperm.xlu0 %76, %v55
    %v78 = vpop.permute.xlu0 %77
    %v80 = vlaneseq
    %v81 = vshrl.u32 %v80, 7
    %v82 = vsub.s32 1, %v81
    %v83 = vrot.slane %v57, %v82
    %v84 = vmul.f32 %v78, %v83
    %v85 = vadd.f32 %v75, %v84
    %v86 = vtanh.pop %v85
    %v87 = vld [vmem:[#allocation2] sm:$0xf]
    %v88 = vld [vmem:[#allocation2 + $0x4] sm:$0xf]
    %v89 = vld [vmem:[#allocation2 + $0x8] sm:$0xf]
    %v90 = vld [vmem:[#allocation2 + $0xc] sm:$0xf]
    %v91 = vld [vmem:[#allocation2 + $0x10] sm:$0xf]
    %v92 = vld [vmem:[#allocation2 + $0x14] sm:$0xf]
    %v93 = vld [vmem:[#allocation2 + $0x18] sm:$0xf]
    %v94 = vld [vmem:[#allocation2 + $0x1c] sm:$0xf]
    %v95 = vld [vmem:[#allocation2 + $0x20] sm:$0xf]
    %v96 = vld [vmem:[#allocation2 + $0x24] sm:$0xf]
    %v97 = vld [vmem:[#allocation2 + $0x28] sm:$0xf]
    %v98 = vld [vmem:[#allocation2 + $0x2c] sm:$0xf]
    %v99 = vld [vmem:[#allocation2 + $0x30] sm:$0xf]
    %v100 = vld [vmem:[#allocation2 + $0x34] sm:$0xf]
    %v101 = vld [vmem:[#allocation2 + $0x38] sm:$0xf]
    %v102 = vld [vmem:[#allocation2 + $0x3c] sm:$0xf]
    %v103 = vld [vmem:[%s4] sm:$0x1]
    %v104 = vpack.c.bf16 %v86, %v86
    %v106 = vlaneseq
    %v107 = vshrl.u32 %v106, 7
    %v108 = vsub.s32 0, %v107
    %v109 = vrot.slane %v103, %v108
    %v127 = vunpack.c.l.b16 %v87
    %v128 = vunpack.c.l.b16 %v88
    %v129 = vunpack.c.l.b16 %v89
    %v130 = vunpack.c.l.b16 %v90
    %v131 = vunpack.c.l.b16 %v91
    %v132 = vunpack.c.l.b16 %v92
    %v133 = vunpack.c.l.b16 %v93
    %v134 = vunpack.c.l.b16 %v94
    %v135 = vunpack.c.l.b16 %v95
    %v136 = vunpack.c.l.b16 %v96
    %v137 = vunpack.c.l.b16 %v97
    %v138 = vunpack.c.l.b16 %v98
    %v139 = vunpack.c.l.b16 %v99
    %v140 = vunpack.c.l.b16 %v100
    %v141 = vunpack.c.l.b16 %v101
    %v142 = vunpack.c.l.b16 %v102
    %v143 = vpack.c.b16 %v128, %v127
    %v144 = vpack.c.b16 %v130, %v129
    %v145 = vpack.c.b16 %v132, %v131
    %v146 = vpack.c.b16 %v134, %v133
    %v147 = vpack.c.b16 %v136, %v135
    %v148 = vpack.c.b16 %v138, %v137
    %v149 = vpack.c.b16 %v140, %v139
    %v150 = vpack.c.b16 %v142, %v141
    %159 = vmatprep.subr.bf16.mxu0 0
    %160 = vmatpush1.bf16.msra.mxu0 %v143
    %161 = vmatprep.subr.bf16.mxu0 0
    %162 = vmatpush1.bf16.msra.mxu0 %v144
    %163 = vmatprep.subr.bf16.mxu0 0
    %164 = vmatpush1.bf16.msra.mxu0 %v145
    %165 = vmatprep.subr.bf16.mxu0 0
    %166 = vmatpush1.bf16.msra.mxu0 %v146
    %167 = vmatprep.subr.bf16.mxu0 0
    %168 = vmatpush1.bf16.msra.mxu0 %v147
    %169 = vmatprep.subr.bf16.mxu0 0
    %170 = vmatpush1.bf16.msra.mxu0 %v148
    %171 = vmatprep.subr.bf16.mxu0 0
    %172 = vmatpush1.bf16.msra.mxu0 %v149
    %173 = vmatprep.subr.bf16.mxu0 0
    %174 = vmatpush1.bf16.msra.mxu0 %v150
    %175 = vmatprep.subr.bf16.mxu0 0
    %176 = vmatpush1.bf16.msra.mxu0 0
    %177 = vmatprep.subr.bf16.mxu0 0
    %178 = vmatpush1.bf16.msra.mxu0 0
    %179 = vmatprep.subr.bf16.mxu0 0
    %180 = vmatpush1.bf16.msra.mxu0 0
    %181 = vmatprep.subr.bf16.mxu0 0
    %182 = vmatpush1.bf16.msra.mxu0 0
    %183 = vmatprep.subr.bf16.mxu0 0
    %184 = vmatpush1.bf16.msra.mxu0 0
    %185 = vmatprep.subr.bf16.mxu0 0
    %186 = vmatpush1.bf16.msra.mxu0 0
    %187 = vmatprep.subr.bf16.mxu0 0
    %188 = vmatpush1.bf16.msra.mxu0 0
    %189 = vmatprep.subr.bf16.mxu0 0
    %190 = vmatpush1.bf16.msra.mxu0 0
    %191 = vmatprep.mubr.bf16.mxu0 0
    %192 = vmatmul.mubr.bf16.gmra.mrb[0].mxu0 %v104
    %v193 = vpop.f32.mrb[0].mxu0
    %v194 = vadd.f32 %v109, %v193
    %v195 = vpop.f32.mrb[0].mxu0
    %v196 = vpop.f32.mrb[0].mxu0
    %v197 = vpop.f32.mrb[0].mxu0
    %198 = vdwg.mxu0
    %v199 = vtanh.pop %v194
    %s200 = scalar_lea.vmem [#allocation2], 64
    %v201 = vld [vmem:[%s200] sm:$0xf]
    %v202 = vld [vmem:[%s200 + $0x4] sm:$0xf]
    %v203 = vld [vmem:[%s200 + $0x8] sm:$0xf]
    %v204 = vld [vmem:[%s200 + $0xc] sm:$0xf]
    %v205 = vld [vmem:[%s200 + $0x10] sm:$0xf]
    %v206 = vld [vmem:[%s200 + $0x14] sm:$0xf]
    %v207 = vld [vmem:[%s200 + $0x18] sm:$0xf]
    %v208 = vld [vmem:[%s200 + $0x1c] sm:$0xf]
    %v209 = vld [vmem:[%s200 + $0x20] sm:$0xf]
    %v210 = vld [vmem:[%s200 + $0x24] sm:$0xf]
    %v211 = vld [vmem:[%s200 + $0x28] sm:$0xf]
    %v212 = vld [vmem:[%s200 + $0x2c] sm:$0xf]
    %v213 = vld [vmem:[%s200 + $0x30] sm:$0xf]
    %v214 = vld [vmem:[%s200 + $0x34] sm:$0xf]
    %v215 = vld [vmem:[%s200 + $0x38] sm:$0xf]
    %v216 = vld [vmem:[%s200 + $0x3c] sm:$0xf]
    %s217 = scalar_lea.vmem %s4, 1
    %v218 = vld [vmem:[%s217] sm:$0x1]
    %v219 = vpack.c.bf16 %v199, %v199
    %v221 = vlaneseq
    %v222 = vshrl.u32 %v221, 7
    %v223 = vsub.s32 0, %v222
    %v224 = vrot.slane %v218, %v223
    %v242 = vunpack.c.l.b16 %v201
    %v243 = vunpack.c.l.b16 %v202
    %v244 = vunpack.c.l.b16 %v203
    %v245 = vunpack.c.l.b16 %v204
    %v246 = vunpack.c.l.b16 %v205
    %v247 = vunpack.c.l.b16 %v206
    %v248 = vunpack.c.l.b16 %v207
    %v249 = vunpack.c.l.b16 %v208
    %v250 = vunpack.c.l.b16 %v209
    %v251 = vunpack.c.l.b16 %v210
    %v252 = vunpack.c.l.b16 %v211
    %v253 = vunpack.c.l.b16 %v212
    %v254 = vunpack.c.l.b16 %v213
    %v255 = vunpack.c.l.b16 %v214
    %v256 = vunpack.c.l.b16 %v215
    %v257 = vunpack.c.l.b16 %v216
    %v258 = vpack.c.b16 %v243, %v242
    %v259 = vpack.c.b16 %v245, %v244
    %v260 = vpack.c.b16 %v247, %v246
    %v261 = vpack.c.b16 %v249, %v248
    %v262 = vpack.c.b16 %v251, %v250
    %v263 = vpack.c.b16 %v253, %v252
    %v264 = vpack.c.b16 %v255, %v254
    %v265 = vpack.c.b16 %v257, %v256
    %274 = vmatprep.subr.bf16.mxu0 0
    %275 = vmatpush1.bf16.msra.mxu0 %v258
    %276 = vmatprep.subr.bf16.mxu0 0
    %277 = vmatpush1.bf16.msra.mxu0 %v259
    %278 = vmatprep.subr.bf16.mxu0 0
    %279 = vmatpush1.bf16.msra.mxu0 %v260
    %280 = vmatprep.subr.bf16.mxu0 0
    %281 = vmatpush1.bf16.msra.mxu0 %v261
    %282 = vmatprep.subr.bf16.mxu0 0
    %283 = vmatpush1.bf16.msra.mxu0 %v262
    %284 = vmatprep.subr.bf16.mxu0 0
    %285 = vmatpush1.bf16.msra.mxu0 %v263
    %286 = vmatprep.subr.bf16.mxu0 0
    %287 = vmatpush1.bf16.msra.mxu0 %v264
    %288 = vmatprep.subr.bf16.mxu0 0
    %289 = vmatpush1.bf16.msra.mxu0 %v265
    %290 = vmatprep.subr.bf16.mxu0 0
    %291 = vmatpush1.bf16.msra.mxu0 0
    %292 = vmatprep.subr.bf16.mxu0 0
    %293 = vmatpush1.bf16.msra.mxu0 0
    %294 = vmatprep.subr.bf16.mxu0 0
    %295 = vmatpush1.bf16.msra.mxu0 0
    %296 = vmatprep.subr.bf16.mxu0 0
    %297 = vmatpush1.bf16.msra.mxu0 0
    %298 = vmatprep.subr.bf16.mxu0 0
    %299 = vmatpush1.bf16.msra.mxu0 0
    %300 = vmatprep.subr.bf16.mxu0 0
    %301 = vmatpush1.bf16.msra.mxu0 0
    %302 = vmatprep.subr.bf16.mxu0 0
    %303 = vmatpush1.bf16.msra.mxu0 0
    %304 = vmatprep.subr.bf16.mxu0 0
    %305 = vmatpush1.bf16.msra.mxu0 0
    %306 = vmatprep.mubr.bf16.mxu0 0
    %307 = vmatmul.mubr.bf16.gmra.mrb[0].mxu0 %v219
    %v308 = vpop.f32.mrb[0].mxu0
    %v309 = vadd.f32 %v224, %v308
    %v310 = vpop.f32.mrb[0].mxu0
    %v311 = vpop.f32.mrb[0].mxu0
    %v312 = vpop.f32.mrb[0].mxu0
    %313 = vdwg.mxu0
    %v314 = vtanh.pop %v309
    %v315 = vpack.c.bf16 %v314, %v314
    %v316 = vld [vmem:[#allocation4] sm:$0xf]
    %v317 = vld [vmem:[#allocation4 + $0x4] sm:$0xf]
    %v318 = vld [vmem:[#allocation4 + $0x8] sm:$0xf]
    %v319 = vld [vmem:[#allocation4 + $0xc] sm:$0xf]
    %v320 = vld [vmem:[#allocation4 + $0x10] sm:$0xf]
    %v321 = vld [vmem:[#allocation4 + $0x14] sm:$0xf]
    %v322 = vld [vmem:[#allocation4 + $0x18] sm:$0xf]
    %v323 = vld [vmem:[#allocation4 + $0x1c] sm:$0xf]
    %v324 = vld [vmem:[#allocation4 + $0x20] sm:$0xf]
    %v325 = vld [vmem:[#allocation4 + $0x24] sm:$0xf]
    %v326 = vld [vmem:[#allocation4 + $0x28] sm:$0xf]
    %v327 = vld [vmem:[#allocation4 + $0x2c] sm:$0xf]
    %v328 = vld [vmem:[#allocation4 + $0x30] sm:$0xf]
    %v329 = vld [vmem:[#allocation4 + $0x34] sm:$0xf]
    %v330 = vld [vmem:[#allocation4 + $0x38] sm:$0xf]
    %v331 = vld [vmem:[#allocation4 + $0x3c] sm:$0xf]
    %v332 = vld [vmem:[%s6] sm:$0x1]
    %v334 = vlaneseq
    %v335 = vshrl.u32 %v334, 7
    %v336 = vsub.s32 0, %v335
    %v337 = vrot.slane %v332, %v336
    %v355 = vunpack.c.l.b16 %v316
    %v356 = vunpack.c.l.b16 %v317
    %v357 = vunpack.c.l.b16 %v318
    %v358 = vunpack.c.l.b16 %v319
    %v359 = vunpack.c.l.b16 %v320
    %v360 = vunpack.c.l.b16 %v321
    %v361 = vunpack.c.l.b16 %v322
    %v362 = vunpack.c.l.b16 %v323
    %v363 = vunpack.c.l.b16 %v324
    %v364 = vunpack.c.l.b16 %v325
    %v365 = vunpack.c.l.b16 %v326
    %v366 = vunpack.c.l.b16 %v327
    %v367 = vunpack.c.l.b16 %v328
    %v368 = vunpack.c.l.b16 %v329
    %v369 = vunpack.c.l.b16 %v330
    %v370 = vunpack.c.l.b16 %v331
    %v371 = vpack.c.b16 %v356, %v355
    %v372 = vpack.c.b16 %v358, %v357
    %v373 = vpack.c.b16 %v360, %v359
    %v374 = vpack.c.b16 %v362, %v361
    %v375 = vpack.c.b16 %v364, %v363
    %v376 = vpack.c.b16 %v366, %v365
    %v377 = vpack.c.b16 %v368, %v367
    %v378 = vpack.c.b16 %v370, %v369
    %387 = vmatprep.subr.bf16.mxu0 0
    %388 = vmatpush1.bf16.msra.mxu0 %v371
    %389 = vmatprep.subr.bf16.mxu0 0
    %390 = vmatpush1.bf16.msra.mxu0 %v372
    %391 = vmatprep.subr.bf16.mxu0 0
    %392 = vmatpush1.bf16.msra.mxu0 %v373
    %393 = vmatprep.subr.bf16.mxu0 0
    %394 = vmatpush1.bf16.msra.mxu0 %v374
    %395 = vmatprep.subr.bf16.mxu0 0
    %396 = vmatpush1.bf16.msra.mxu0 %v375
    %397 = vmatprep.subr.bf16.mxu0 0
    %398 = vmatpush1.bf16.msra.mxu0 %v376
    %399 = vmatprep.subr.bf16.mxu0 0
    %400 = vmatpush1.bf16.msra.mxu0 %v377
    %401 = vmatprep.subr.bf16.mxu0 0
    %402 = vmatpush1.bf16.msra.mxu0 %v378
    %403 = vmatprep.subr.bf16.mxu0 0
    %404 = vmatpush1.bf16.msra.mxu0 0
    %405 = vmatprep.subr.bf16.mxu0 0
    %406 = vmatpush1.bf16.msra.mxu0 0
    %407 = vmatprep.subr.bf16.mxu0 0
    %408 = vmatpush1.bf16.msra.mxu0 0
    %409 = vmatprep.subr.bf16.mxu0 0
    %410 = vmatpush1.bf16.msra.mxu0 0
    %411 = vmatprep.subr.bf16.mxu0 0
    %412 = vmatpush1.bf16.msra.mxu0 0
    %413 = vmatprep.subr.bf16.mxu0 0
    %414 = vmatpush1.bf16.msra.mxu0 0
    %415 = vmatprep.subr.bf16.mxu0 0
    %416 = vmatpush1.bf16.msra.mxu0 0
    %417 = vmatprep.subr.bf16.mxu0 0
    %418 = vmatpush1.bf16.msra.mxu0 0
    %419 = vmatprep.mubr.bf16.mxu0 0
    %420 = vmatmul.mubr.bf16.gmra.mrb[0].mxu0 %v315
    %v421 = vpop.f32.mrb[0].mxu0
    %v422 = vadd.f32 %v337, %v421
    %v423 = vpop.f32.mrb[0].mxu0
    %v424 = vpop.f32.mrb[0].mxu0
    %v425 = vpop.f32.mrb[0].mxu0
    %426 = vdwg.mxu0
    %vm427 = vcmask 7168
    %428 = vst.msk [vmem:[%s7] sm:$0xff] %vm427, %v422
    // Predicated region
    $region38: #{tpu_custom_call.1} parent=1 // pred_check
      _
    $region39: #{tpu_custom_call.1} parent=1 // pred_check_branch
      %430 = sbr.rel (0) target = $region41
    $region40: #{tpu_custom_call.1} parent=1 // pred_region
      _
    $region41: #{tpu_custom_call.1} parent=1 // pred_fallthru
      _
    // Predicated region
    $region42: #{tpu_custom_call.1} parent=1 // pred_check
      _
    $region43: #{tpu_custom_call.1} parent=1 // pred_check_branch
      %432 = sbr.rel (0) target = $region45
    $region44: #{tpu_custom_call.1} parent=1 // pred_region
      _
    $region45: #{tpu_custom_call.1} parent=1 // pred_fallthru
      _
    %433 = vsyncpa [#allocation3], 1
    %434 = vsyncpa [#allocation5], 1

</llo_original>
